<compile_context>
chip_gen: v7x
topology: tpu7x:2x2x1
jax: 0.10.0
libtpu: 0.0.40
codegen_flags: <defaults>
</compile_context>

<pallas_src>
import functools

import jax
import jax.numpy as jnp
from jax.experimental import pallas as pl
from jax.experimental.pallas import tpu as pltpu


def _round_up(x, m):
    return ((x + m - 1) // m) * m


# ---------------------------------------------------------------------------
# Kernels
# ---------------------------------------------------------------------------

def _refine_on_mxu(region_ref, region_weight, inv_r):
    """refined[b,:] = (1/R) * region_weight[b,:] @ region_feature[b,:,:].

    Per-sample 2D row-dots (statically unrolled over the batch tile) keep the
    R-reduction on the MXU and avoid materializing a (TB, R, D) broadcast temp,
    while only using plain 2D dot_general (robust Mosaic lowering).
    """
    tb = region_weight.shape[0]
    rw = region_weight.astype(region_ref.dtype)          # matmul operand dtype (bf16/f32)
    rows = [
        jnp.dot(rw[b:b + 1, :], region_ref[b], preferred_element_type=jnp.float32)
        for b in range(tb)
    ]
    return jnp.concatenate(rows, axis=0) * inv_r          # (TB, D) f32


def _dvgs_drs_kernel(region_ref, global_ref, w_drs_t_ref, w_cls_t_ref,
                     region_pred_ref, global_pred_ref, *, inv_r):
    """args.is_training_DRS == True branch of DVGS.forward (batch-tiled)."""
    tb = global_ref.shape[0]
    gf = global_ref[...]                                                # (TB, D)  compute dtype
    # --- DynamicRegionSelection ---
    region_weight = jnp.dot(gf, w_drs_t_ref[...],
                            preferred_element_type=jnp.float32)         # (TB, R_pad) f32
    refined = _refine_on_mxu(region_ref, region_weight, inv_r)          # (TB, D) f32
    # --- shared attribute classifier (bias=False), fused into one MXU call ---
    stacked = jnp.concatenate([refined.astype(gf.dtype), gf], axis=0)   # (2*TB, D)
    preds = jnp.dot(stacked, w_cls_t_ref[...],
                    preferred_element_type=jnp.float32)                 # (2*TB, A_pad) f32
    region_pred_ref[...] = preds[:tb]
    global_pred_ref[...] = preds[tb:]


def _dvgs_full_kernel(region_ref, global_ref, proto_ref,
                      w_drs_t_ref, w_cls_t_ref,
                      w1_t_ref, b1_ref, w2_t_ref, b2_ref,
                      region_pred_ref, global_pred_ref, refined_proto_ref, *, inv_r):
    """args.is_training_DRS == False branch (DRS + classifier + DAS).  Requires B == 1."""
    tb = global_ref.shape[0]                                            # == 1
    gf = global_ref[...]                                                # (1, D) compute dtype
    # --- DynamicRegionSelection ---
    region_weight = jnp.dot(gf, w_drs_t_ref[...],
                            preferred_element_type=jnp.float32)         # (1, R_pad) f32
    refined = _refine_on_mxu(region_ref, region_weight, inv_r)          # (1, D) f32
    # --- shared attribute classifier (bias=False), fused ---
    stacked = jnp.concatenate([refined.astype(gf.dtype), gf], axis=0)   # (2, D)
    preds = jnp.dot(stacked, w_cls_t_ref[...],
                    preferred_element_type=jnp.float32)                 # (2, A_pad)
    region_pred_ref[...] = preds[:tb]
    global_pred_ref[...] = preds[tb:]
    # --- DynamicAttributeSelection ---
    # PyTorch: refined.mean(dim=1) is (B,), which only broadcasts against (B, D) when
    # B == 1 (the supported case here); for B == 1 keepdims gives identical values.
    gf32 = gf.astype(jnp.float32)
    fused = jnp.mean(refined, axis=1, keepdims=True) + gf32             # (1, D) f32
    h = jnp.dot(fused.astype(gf.dtype), w1_t_ref[...],
                preferred_element_type=jnp.float32) + b1_ref[...]       # (1, H) f32
    h = jnp.maximum(h, 0.0)                                             # ReLU
    logits = jnp.dot(h.astype(gf.dtype), w2_t_ref[...],
                     preferred_element_type=jnp.float32) + b2_ref[...]  # (1, A_pad) f32
    # nn.Softmax() with no dim -> dim=1 for a 2-D input.  Padded lanes carry -1e30 bias
    # so they contribute exp(..) == 0.  Reciprocal goes to the (idle) EUP slot.
    m = jnp.max(logits, axis=-1, keepdims=True)
    e = jnp.exp(logits - m)
    attr_weight = e * pl.reciprocal(jnp.sum(e, axis=-1, keepdims=True), approx=True)
    # unsqueeze/repeat + einsum('bir,bir->bir') == broadcast elementwise product (f32)
    refined_proto_ref[...] = attr_weight[:, None, :] * proto_ref[...][None, :, :]


# ---------------------------------------------------------------------------
# Parameter init / one-time prep (hoisted transposes, casts, padding)
# ---------------------------------------------------------------------------

def init_dvgs_params(key, v_embedding_dim, region_num, attr_num):
    """Deterministic PyTorch-default-style (uniform +-1/sqrt(fan_in)) parameter init."""
    def linear_w(k, fan_out, fan_in):
        bound = 1.0 / (fan_in ** 0.5)
        return jax.random.uniform(k, (fan_out, fan_in), jnp.float32, -bound, bound)

    def linear_b(k, fan_out, fan_in):
        bound = 1.0 / (fan_in ** 0.5)
        return jax.random.uniform(k, (1, fan_out), jnp.float32, -bound, bound)

    ks = jax.random.split(key, 6)
    hidden = v_embedding_dim // 2
    return {
        "w_drs": linear_w(ks[0], region_num, v_embedding_dim),   # DRS.fc (bias=False)
        "w_cls": linear_w(ks[1], attr_num, v_embedding_dim),     # attribute_classifier
        "w1": linear_w(ks[2], hidden, v_embedding_dim),          # DAS.fc1
        "b1": linear_b(ks[3], hidden, v_embedding_dim),
        "w2": linear_w(ks[4], attr_num, hidden),                 # DAS.fc2
        "b2": linear_b(ks[5], attr_num, hidden),
    }


def prepare_dvgs_params(params, attrs_mat, *, compute_dtype=jnp.bfloat16):
    """One-time prep: transpose weights to (in,out), cast matmul operands to
    compute_dtype, pad R to a multiple of 8 and A to a multiple of 128 (lane-dense)."""
    R, D = params["w_drs"].shape
    A = params["w_cls"].shape[0]
    H = params["w1"].shape[0]
    C = attrs_mat.shape[0]
    R_pad = _round_up(R, 8)
    A_pad = _round_up(A, 128)

    w_drs_t = jnp.zeros((D, R_pad), compute_dtype).at[:, :R].set(
        params["w_drs"].T.astype(compute_dtype))
    w_cls_t = jnp.zeros((D, A_pad), compute_dtype).at[:, :A].set(
        params["w_cls"].T.astype(compute_dtype))
    w1_t = params["w1"].T.astype(compute_dtype)                               # (D, H)
    w2_t = jnp.zeros((H, A_pad), compute_dtype).at[:, :A].set(
        params["w2"].T.astype(compute_dtype))
    b1 = params["b1"].astype(jnp.float32)                                     # (1, H)
    # -1e30 on padded attribute lanes -> exp() underflows to 0 in the softmax.
    b2 = jnp.full((1, A_pad), -1e30, jnp.float32).at[:, :A].set(
        params["b2"].astype(jnp.float32))
    attrs_pad = jnp.zeros((C, A_pad), jnp.float32).at[:, :A].set(
        attrs_mat.astype(jnp.float32))

    return {
        "w_drs_t": w_drs_t, "w_cls_t": w_cls_t, "w1_t": w1_t, "b1": b1,
        "w2_t": w2_t, "b2": b2, "attrs_pad": attrs_pad,
        "R": R, "R_pad": R_pad, "A": A, "A_pad": A_pad, "D": D, "H": H, "C": C,
        "compute_dtype": compute_dtype,
    }


# ---------------------------------------------------------------------------
# Forward wrapper
# ---------------------------------------------------------------------------

def dvgs_forward(region_feature, global_feature, prep, *,
                 is_training_DRS=False, batch_tile=8):
    """DVGS.forward head.  `prep` comes from prepare_dvgs_params (weights already
    transposed / cast / padded).  batch_tile: 8 is v7x-safe at D=1024,R=196 in f32;
    v6e/v5e (128 MiB VMEM) or bf16 inputs can use larger tiles."""
    cd = prep["compute_dtype"]
    B, R, D = region_feature.shape
    R_pad, A_pad, A = prep["R_pad"], prep["A_pad"], prep["A"]
    inv_r = 1.0 / R

    rf = region_feature.astype(cd)
    gf = global_feature.astype(cd)
    if R_pad > R:
        rf = jnp.pad(rf, ((0, 0), (0, R_pad - R), (0, 0)))

    if is_training_DRS:
        TB = min(batch_tile, _round_up(B, 8))          # sublane-aligned batch tile
        B_pad = _round_up(B, TB)
        if B_pad > B:
            rf = jnp.pad(rf, ((0, B_pad - B), (0, 0), (0, 0)))
            gf = jnp.pad(gf, ((0, B_pad - B), (0, 0)))
        grid = (B_pad // TB,)
        out_shape = (jax.ShapeDtypeStruct((B_pad, A_pad), jnp.float32),
                     jax.ShapeDtypeStruct((B_pad, A_pad), jnp.float32))
        region_pred, global_pred = pl.pallas_call(
            functools.partial(_dvgs_drs_kernel, inv_r=inv_r),
            grid=grid,
            in_specs=[
                pl.BlockSpec((TB, R_pad, D), lambda i: (i, 0, 0)),   # batch-tiled
                pl.BlockSpec((TB, D), lambda i: (i, 0)),             # batch-tiled
                pl.BlockSpec((D, R_pad), lambda i: (0, 0)),          # resident weight
                pl.BlockSpec((D, A_pad), lambda i: (0, 0)),          # resident weight
            ],
            out_specs=(
                pl.BlockSpec((TB, A_pad), lambda i: (i, 0)),
                pl.BlockSpec((TB, A_pad), lambda i: (i, 0)),
            ),
            out_shape=out_shape,
            compiler_params=pltpu.CompilerParams(
                dimension_semantics=("parallel",)),                  # megacore / v7x
        )(rf, gf, prep["w_drs_t"], prep["w_cls_t"])
        return region_pred[:B, :A], global_pred[:B, :A]

    # Full path: the PyTorch DAS does mean(dim=1) + global_feature, which only
    # broadcasts for B == 1 (or B == D); we reproduce the B == 1 case.
    assert B == 1, "non-DRS path reproduces PyTorch's (B,)+(B,D) broadcast; needs B == 1"
    C = prep["attrs_pad"].shape[0]
    H = prep["H"]
    out_shape = (jax.ShapeDtypeStruct((B, A_pad), jnp.float32),
                 jax.ShapeDtypeStruct((B, A_pad), jnp.float32),
                 jax.ShapeDtypeStruct((B, C, A_pad), jnp.float32))
    region_pred, global_pred, refined_proto = pl.pallas_call(
        functools.partial(_dvgs_full_kernel, inv_r=inv_r),
        grid=(1,),
        in_specs=[
            pl.BlockSpec((B, R_pad, D), lambda i: (0, 0, 0)),
            pl.BlockSpec((B, D), lambda i: (0, 0)),
            pl.BlockSpec((C, A_pad), lambda i: (0, 0)),
            pl.BlockSpec((D, R_pad), lambda i: (0, 0)),
            pl.BlockSpec((D, A_pad), lambda i: (0, 0)),
            pl.BlockSpec((D, H), lambda i: (0, 0)),
            pl.BlockSpec((1, H), lambda i: (0, 0)),
            pl.BlockSpec((H, A_pad), lambda i: (0, 0)),
            pl.BlockSpec((1, A_pad), lambda i: (0, 0)),
        ],
        out_specs=(
            pl.BlockSpec((B, A_pad), lambda i: (0, 0)),
            pl.BlockSpec((B, A_pad), lambda i: (0, 0)),
            pl.BlockSpec((B, C, A_pad), lambda i: (0, 0, 0)),
        ),
        out_shape=out_shape,
        compiler_params=pltpu.CompilerParams(
            dimension_semantics=("arbitrary",)),
    )(rf, gf, prep["attrs_pad"], prep["w_drs_t"], prep["w_cls_t"],
      prep["w1_t"], prep["b1"], prep["w2_t"], prep["b2"])
    return region_pred[:, :A], global_pred[:, :A], refined_proto[:, :, :A]


# ---------------------------------------------------------------------------
# Pure-JAX reference (mirrors the kernel's cast points for dtype-faithful checks)
# ---------------------------------------------------------------------------

def dvgs_reference(region_feature, global_feature, attrs_mat, params, *,
                   is_training_DRS=False, compute_dtype=jnp.float32):
    cd = compute_dtype
    B, R, D = region_feature.shape
    rf = region_feature.astype(cd)
    gf = global_feature.astype(cd)
    w_drs_t = params["w_drs"].T.astype(cd)
    w_cls_t = params["w_cls"].T.astype(cd)
    region_weight = jnp.dot(gf, w_drs_t, preferred_element_type=jnp.float32)
    refined = jnp.einsum("br,brd->bd", region_weight.astype(cd), rf,
                         preferred_element_type=jnp.float32) * (1.0 / R)
    region_pred = jnp.dot(refined.astype(cd), w_cls_t, preferred_element_type=jnp.float32)
    global_pred = jnp.dot(gf, w_cls_t, preferred_element_type=jnp.float32)
    if is_training_DRS:
        return region_pred, global_pred
    # B == 1 case of the PyTorch broadcast
    fused = jnp.mean(refined, axis=1, keepdims=True) + gf.astype(jnp.float32)
    h = jnp.dot(fused.astype(cd), params["w1"].T.astype(cd),
                preferred_element_type=jnp.float32) + params["b1"]
    h = jnp.maximum(h, 0.0)
    logits = jnp.dot(h.astype(cd), params["w2"].T.astype(cd),
                     preferred_element_type=jnp.float32) + params["b2"]
    attr_weight = jax.nn.softmax(logits, axis=-1)
    refined_proto = attr_weight[:, None, :] * attrs_mat[None, :, :]
    return region_pred, global_pred, refined_proto


if __name__ == "__main__":
    # Small stand-ins for (v_embedding_dim=1024, region_num=196, attr_num, num_classes)
    D, R, A, C = 32, 8, 16, 10

    key = jax.random.PRNGKey(0)
    kp, k1, k2, k3, k4, k5 = jax.random.split(key, 6)
    params = init_dvgs_params(kp, D, R, A)
    attrs_mat = jax.random.normal(k3, (C, A), jnp.float32)       # args.attrs_mat

    # Inputs: full path needs B == 1 (PyTorch DAS broadcast); DRS path uses B == 2.
    B = 1
    rf1 = jax.random.normal(k1, (B, R, D), jnp.float32)
    gf1 = jax.random.normal(k2, (B, D), jnp.float32)
    B2 = 2
    rf2 = jax.random.normal(k4, (B2, R, D), jnp.float32)
    gf2 = jax.random.normal(k5, (B2, D), jnp.float32)

    for cd in (jnp.bfloat16, jnp.float32):
        tol = 2e-2
        prep = prepare_dvgs_params(params, attrs_mat, compute_dtype=cd)

        # Full path (is_training_DRS=False), B == 1.
        out_full = jax.block_until_ready(
            dvgs_forward(rf1, gf1, prep, is_training_DRS=False))
        ref_full = dvgs_reference(rf1, gf1, attrs_mat, params,
                                  is_training_DRS=False, compute_dtype=cd)
        for o, r in zip(out_full, ref_full):
            assert o.shape == r.shape, (o.shape, r.shape)
            assert jnp.allclose(o, r, atol=tol, rtol=tol), (
                str(cd), float(jnp.max(jnp.abs(o - r))))

        # DRS-training path (is_training_DRS=True), B == 2 (padded to the batch tile).
        out_drs = jax.block_until_ready(
            dvgs_forward(rf2, gf2, prep, is_training_DRS=True))
        ref_drs = dvgs_reference(rf2, gf2, attrs_mat, params,
                                 is_training_DRS=True, compute_dtype=cd)
        for o, r in zip(out_drs, ref_drs):
            assert o.shape == r.shape, (o.shape, r.shape)
            assert jnp.allclose(o, r, atol=tol, rtol=tol), (
                str(cd), float(jnp.max(jnp.abs(o - r))))

    print("KERNEL_OK")
</pallas_src>

<mosaic_0001>
module attributes {stable_mosaic.version = 11 : i64} {
  func.func @_dvgs_full_kernel(%arg0: i32, %arg1: memref<1x8x32xbf16, #tpu.memory_space<vmem>>, %arg2: memref<1x32xbf16, #tpu.memory_space<vmem>>, %arg3: memref<10x128xf32, #tpu.memory_space<vmem>>, %arg4: memref<32x8xbf16, #tpu.memory_space<vmem>>, %arg5: memref<32x128xbf16, #tpu.memory_space<vmem>>, %arg6: memref<32x16xbf16, #tpu.memory_space<vmem>>, %arg7: memref<1x16xf32, #tpu.memory_space<vmem>>, %arg8: memref<16x128xbf16, #tpu.memory_space<vmem>>, %arg9: memref<1x128xf32, #tpu.memory_space<vmem>>, %arg10: memref<1x128xf32, #tpu.memory_space<vmem>>, %arg11: memref<1x128xf32, #tpu.memory_space<vmem>>, %arg12: memref<1x10x128xf32, #tpu.memory_space<vmem>>) attributes {dimension_semantics = [#tpu.dimension_semantics<arbitrary>], iteration_bounds = array<i64: 1>, scalar_prefetch = 0 : i64, scratch_operands = 0 : i64, tpu.core_type = #tpu.core_type<tc>, window_params = [{pipeline_mode = #tpu.pipeline_mode<synchronous>, transform_indices = @transform_0, window_bounds = array<i64: 1, 8, 32>}, {pipeline_mode = #tpu.pipeline_mode<synchronous>, transform_indices = @transform_1, window_bounds = array<i64: 1, 32>}, {pipeline_mode = #tpu.pipeline_mode<synchronous>, transform_indices = @transform_2, window_bounds = array<i64: 10, 128>}, {pipeline_mode = #tpu.pipeline_mode<synchronous>, transform_indices = @transform_3, window_bounds = array<i64: 32, 8>}, {pipeline_mode = #tpu.pipeline_mode<synchronous>, transform_indices = @transform_4, window_bounds = array<i64: 32, 128>}, {pipeline_mode = #tpu.pipeline_mode<synchronous>, transform_indices = @transform_5, window_bounds = array<i64: 32, 16>}, {pipeline_mode = #tpu.pipeline_mode<synchronous>, transform_indices = @transform_6, window_bounds = array<i64: 1, 16>}, {pipeline_mode = #tpu.pipeline_mode<synchronous>, transform_indices = @transform_7, window_bounds = array<i64: 16, 128>}, {pipeline_mode = #tpu.pipeline_mode<synchronous>, transform_indices = @transform_8, window_bounds = array<i64: 1, 128>}, {pipeline_mode = #tpu.pipeline_mode<synchronous>, transform_indices = @transform_9, window_bounds = array<i64: 1, 128>}, {pipeline_mode = #tpu.pipeline_mode<synchronous>, transform_indices = @transform_10, window_bounds = array<i64: 1, 128>}, {pipeline_mode = #tpu.pipeline_mode<synchronous>, transform_indices = @transform_11, window_bounds = array<i64: 1, 10, 128>}]} {
    %c0 = arith.constant 0 : index
    %c0_0 = arith.constant 0 : index
    %0 = vector.load %arg2[%c0, %c0_0] : memref<1x32xbf16, #tpu.memory_space<vmem>>, vector<1x32xbf16>
    %c0_1 = arith.constant 0 : index
    %c0_2 = arith.constant 0 : index
    %1 = vector.load %arg4[%c0_1, %c0_2] : memref<32x8xbf16, #tpu.memory_space<vmem>>, vector<32x8xbf16>
    %cst = arith.constant dense<0.000000e+00> : vector<1x8xf32>
    %2 = tpu.matmul %0, %1, %cst {dimension_numbers = #tpu.dot_dimension_numbers<[1], [0], [0], [1], [0, 0, 1, 1], [], []>} : vector<1x32xbf16>, vector<32x8xbf16>, vector<1x8xf32> -> vector<1x8xf32>
    %3 = arith.truncf %2 : vector<1x8xf32> to vector<1x8xbf16>
    %c0_3 = arith.constant 0 : index
    %c0_4 = arith.constant 0 : index
    %c0_5 = arith.constant 0 : index
    %4 = vector.load %arg1[%c0_3, %c0_4, %c0_5] : memref<1x8x32xbf16, #tpu.memory_space<vmem>>, vector<1x8x32xbf16>
    %5 = vector.shape_cast %4 : vector<1x8x32xbf16> to vector<8x32xbf16>
    %cst_6 = arith.constant dense<0.000000e+00> : vector<1x32xf32>
    %6 = tpu.matmul %3, %5, %cst_6 {dimension_numbers = #tpu.dot_dimension_numbers<[1], [0], [0], [1], [0, 0, 1, 1], [], []>} : vector<1x8xbf16>, vector<8x32xbf16>, vector<1x32xf32> -> vector<1x32xf32>
    %cst_7 = arith.constant 1.250000e-01 : f32
    %7 = vector.broadcast %cst_7 : f32 to vector<1x32xf32>
    %8 = arith.mulf %6, %7 : vector<1x32xf32>
    %9 = arith.truncf %8 : vector<1x32xf32> to vector<1x32xbf16>
    %10 = tpu.concatenate %9, %0 in 0 : vector<1x32xbf16>, vector<1x32xbf16> -> vector<2x32xbf16>
    %c0_8 = arith.constant 0 : index
    %c0_9 = arith.constant 0 : index
    %11 = vector.load %arg5[%c0_8, %c0_9] : memref<32x128xbf16, #tpu.memory_space<vmem>>, vector<32x128xbf16>
    %cst_10 = arith.constant dense<0.000000e+00> : vector<2x128xf32>
    %12 = tpu.matmul %10, %11, %cst_10 {dimension_numbers = #tpu.dot_dimension_numbers<[1], [0], [0], [1], [0, 0, 1, 1], [], []>} : vector<2x32xbf16>, vector<32x128xbf16>, vector<2x128xf32> -> vector<2x128xf32>
    %13 = vector.extract_strided_slice %12 {offsets = [0, 0], sizes = [1, 128], strides = [1, 1]} : vector<2x128xf32> to vector<1x128xf32>
    %c0_11 = arith.constant 0 : index
    %c0_12 = arith.constant 0 : index
    %14 = vector.load %arg10[%c0_11, %c0_12] : memref<1x128xf32, #tpu.memory_space<vmem>>, vector<1x128xf32>
    tpu.vector_store %arg10[%c0_11, %c0_12], %13 {strides = array<i32>} : memref<1x128xf32, #tpu.memory_space<vmem>>, vector<1x128xf32>,
    %15 = vector.extract_strided_slice %12 {offsets = [1, 0], sizes = [1, 128], strides = [1, 1]} : vector<2x128xf32> to vector<1x128xf32>
    %c0_13 = arith.constant 0 : index
    %c0_14 = arith.constant 0 : index
    %16 = vector.load %arg11[%c0_13, %c0_14] : memref<1x128xf32, #tpu.memory_space<vmem>>, vector<1x128xf32>
    tpu.vector_store %arg11[%c0_13, %c0_14], %15 {strides = array<i32>} : memref<1x128xf32, #tpu.memory_space<vmem>>, vector<1x128xf32>,
    %17 = arith.extf %0 : vector<1x32xbf16> to vector<1x32xf32>
    %cst_15 = arith.constant dense<0.000000e+00> : vector<1xf32>
    %18 = vector.multi_reduction <add>, %8, %cst_15 [1] : vector<1x32xf32> to vector<1xf32>
    %19 = vector.shape_cast %18 : vector<1xf32> to vector<1x1xf32>
    %cst_16 = arith.constant 3.200000e+01 : f32
    %20 = vector.broadcast %cst_16 : f32 to vector<1x1xf32>
    %21 = arith.divf %19, %20 : vector<1x1xf32>
    %22 = vector.broadcast %21 : vector<1x1xf32> to vector<1x32xf32>
    %23 = arith.addf %22, %17 : vector<1x32xf32>
    %24 = arith.truncf %23 : vector<1x32xf32> to vector<1x32xbf16>
    %c0_17 = arith.constant 0 : index
    %c0_18 = arith.constant 0 : index
    %25 = vector.load %arg6[%c0_17, %c0_18] : memref<32x16xbf16, #tpu.memory_space<vmem>>, vector<32x16xbf16>
    %cst_19 = arith.constant dense<0.000000e+00> : vector<1x16xf32>
    %26 = tpu.matmul %24, %25, %cst_19 {dimension_numbers = #tpu.dot_dimension_numbers<[1], [0], [0], [1], [0, 0, 1, 1], [], []>} : vector<1x32xbf16>, vector<32x16xbf16>, vector<1x16xf32> -> vector<1x16xf32>
    %c0_20 = arith.constant 0 : index
    %c0_21 = arith.constant 0 : index
    %27 = vector.load %arg7[%c0_20, %c0_21] : memref<1x16xf32, #tpu.memory_space<vmem>>, vector<1x16xf32>
    %28 = arith.addf %26, %27 : vector<1x16xf32>
    %cst_22 = arith.constant 0.000000e+00 : f32
    %29 = vector.broadcast %cst_22 : f32 to vector<1x16xf32>
    %30 = arith.maximumf %28, %29 : vector<1x16xf32>
    %31 = arith.truncf %30 : vector<1x16xf32> to vector<1x16xbf16>
    %c0_23 = arith.constant 0 : index
    %c0_24 = arith.constant 0 : index
    %32 = vector.load %arg8[%c0_23, %c0_24] : memref<16x128xbf16, #tpu.memory_space<vmem>>, vector<16x128xbf16>
    %cst_25 = arith.constant dense<0.000000e+00> : vector<1x128xf32>
    %33 = tpu.matmul %31, %32, %cst_25 {dimension_numbers = #tpu.dot_dimension_numbers<[1], [0], [0], [1], [0, 0, 1, 1], [], []>} : vector<1x16xbf16>, vector<16x128xbf16>, vector<1x128xf32> -> vector<1x128xf32>
    %c0_26 = arith.constant 0 : index
    %c0_27 = arith.constant 0 : index
    %34 = vector.load %arg9[%c0_26, %c0_27] : memref<1x128xf32, #tpu.memory_space<vmem>>, vector<1x128xf32>
    %35 = arith.addf %33, %34 : vector<1x128xf32>
    %cst_28 = arith.constant dense<0xFF800000> : vector<1xf32>
    %36 = vector.multi_reduction <maximumf>, %35, %cst_28 [1] : vector<1x128xf32> to vector<1xf32>
    %37 = vector.shape_cast %36 : vector<1xf32> to vector<1x1xf32>
    %38 = vector.broadcast %37 : vector<1x1xf32> to vector<1x128xf32>
    %39 = arith.subf %35, %38 : vector<1x128xf32>
    %40 = math.exp %39 : vector<1x128xf32>
    %cst_29 = arith.constant dense<0.000000e+00> : vector<1xf32>
    %41 = vector.multi_reduction <add>, %40, %cst_29 [1] : vector<1x128xf32> to vector<1xf32>
    %42 = vector.shape_cast %41 : vector<1xf32> to vector<1x1xf32>
    %43 = tpu.reciprocal %42 {approx = true} : vector<1x1xf32> -> vector<1x1xf32>
    %44 = vector.broadcast %43 : vector<1x1xf32> to vector<1x128xf32>
    %45 = arith.mulf %40, %44 : vector<1x128xf32>
    %46 = vector.shape_cast %45 : vector<1x128xf32> to vector<1x1x128xf32>
    %c0_30 = arith.constant 0 : index
    %c0_31 = arith.constant 0 : index
    %47 = vector.load %arg3[%c0_30, %c0_31] : memref<10x128xf32, #tpu.memory_space<vmem>>, vector<10x128xf32>
    %48 = vector.shape_cast %47 : vector<10x128xf32> to vector<1x10x128xf32>
    %49 = vector.broadcast %46 : vector<1x1x128xf32> to vector<1x10x128xf32>
    %50 = arith.mulf %49, %48 : vector<1x10x128xf32>
    %c0_32 = arith.constant 0 : index
    %c0_33 = arith.constant 0 : index
    %c0_34 = arith.constant 0 : index
    %51 = vector.load %arg12[%c0_32, %c0_33, %c0_34] : memref<1x10x128xf32, #tpu.memory_space<vmem>>, vector<1x10x128xf32>
    tpu.vector_store %arg12[%c0_32, %c0_33, %c0_34], %50 {strides = array<i32>} : memref<1x10x128xf32, #tpu.memory_space<vmem>>, vector<1x10x128xf32>,
    return
  }
  func.func @transform_0(%arg0: i32) -> (i32, i32, i32) {
    %c0_i32 = arith.constant 0 : i32
    %c0_i32_0 = arith.constant 0 : i32
    %c0_i32_1 = arith.constant 0 : i32
    %c0_i32_2 = arith.constant 0 : i32
    return %c0_i32, %c0_i32_0, %c0_i32_1 : i32, i32, i32
  }
  func.func @transform_1(%arg0: i32) -> (i32, i32) {
    %c0_i32 = arith.constant 0 : i32
    %c0_i32_0 = arith.constant 0 : i32
    %c0_i32_1 = arith.constant 0 : i32
    return %c0_i32, %c0_i32_0 : i32, i32
  }
  func.func @transform_2(%arg0: i32) -> (i32, i32) {
    %c0_i32 = arith.constant 0 : i32
    %c0_i32_0 = arith.constant 0 : i32
    %c0_i32_1 = arith.constant 0 : i32
    return %c0_i32, %c0_i32_0 : i32, i32
  }
  func.func @transform_3(%arg0: i32) -> (i32, i32) {
    %c0_i32 = arith.constant 0 : i32
    %c0_i32_0 = arith.constant 0 : i32
    %c0_i32_1 = arith.constant 0 : i32
    return %c0_i32, %c0_i32_0 : i32, i32
  }
  func.func @transform_4(%arg0: i32) -> (i32, i32) {
    %c0_i32 = arith.constant 0 : i32
    %c0_i32_0 = arith.constant 0 : i32
    %c0_i32_1 = arith.constant 0 : i32
    return %c0_i32, %c0_i32_0 : i32, i32
  }
  func.func @transform_5(%arg0: i32) -> (i32, i32) {
    %c0_i32 = arith.constant 0 : i32
    %c0_i32_0 = arith.constant 0 : i32
    %c0_i32_1 = arith.constant 0 : i32
    return %c0_i32, %c0_i32_0 : i32, i32
  }
  func.func @transform_6(%arg0: i32) -> (i32, i32) {
    %c0_i32 = arith.constant 0 : i32
    %c0_i32_0 = arith.constant 0 : i32
    %c0_i32_1 = arith.constant 0 : i32
    return %c0_i32, %c0_i32_0 : i32, i32
  }
  func.func @transform_7(%arg0: i32) -> (i32, i32) {
    %c0_i32 = arith.constant 0 : i32
    %c0_i32_0 = arith.constant 0 : i32
    %c0_i32_1 = arith.constant 0 : i32
    return %c0_i32, %c0_i32_0 : i32, i32
  }
  func.func @transform_8(%arg0: i32) -> (i32, i32) {
    %c0_i32 = arith.constant 0 : i32
    %c0_i32_0 = arith.constant 0 : i32
    %c0_i32_1 = arith.constant 0 : i32
    return %c0_i32, %c0_i32_0 : i32, i32
  }
  func.func @transform_9(%arg0: i32) -> (i32, i32) {
    %c0_i32 = arith.constant 0 : i32
    %c0_i32_0 = arith.constant 0 : i32
    %c0_i32_1 = arith.constant 0 : i32
    return %c0_i32, %c0_i32_0 : i32, i32
  }
  func.func @transform_10(%arg0: i32) -> (i32, i32) {
    %c0_i32 = arith.constant 0 : i32
    %c0_i32_0 = arith.constant 0 : i32
    %c0_i32_1 = arith.constant 0 : i32
    return %c0_i32, %c0_i32_0 : i32, i32
  }
  func.func @transform_11(%arg0: i32) -> (i32, i32, i32) {
    %c0_i32 = arith.constant 0 : i32
    %c0_i32_0 = arith.constant 0 : i32
    %c0_i32_1 = arith.constant 0 : i32
    %c0_i32_2 = arith.constant 0 : i32
    return %c0_i32, %c0_i32_0, %c0_i32_1 : i32, i32, i32
  }
}

</mosaic_0001>

<llo_original>
// kernel: tpu_custom_call.1
$region0: #{tpu_custom_call.1}
  #allocation0 [shape = 'u32[]', space=smem, size = 0x4, offset = 0x4, fixed_abs, tag = 'smem constant byte address 0x4 - core index']
  #allocation1 [shape = 'u32[144,128]{1,0:T(1,128)}', space=vmem, size = 0x12000, scoped, tag = 'internal scratch']
  %s0 = inlined_call_operand.hbm [shape: bf16[1,8,32], index: 0, kind: input, shape index: {}]
  %s1 = inlined_call_operand.vmem [shape: bf16[1,32], index: 1, kind: input, shape index: {}]
  %s2 = inlined_call_operand.vmem [shape: f32[10,128], index: 2, kind: input, shape index: {}]
  %s3 = inlined_call_operand.vmem [shape: bf16[32,8], index: 3, kind: input, shape index: {}]
  %s4 = inlined_call_operand.vmem [shape: bf16[32,128], index: 4, kind: input, shape index: {}]
  %s5 = inlined_call_operand.vmem [shape: bf16[32,16], index: 5, kind: input, shape index: {}]
  %s6 = inlined_call_operand.vmem [shape: f32[1,16], index: 6, kind: input, shape index: {}]
  %s7 = inlined_call_operand.vmem [shape: bf16[16,128], index: 7, kind: input, shape index: {}]
  %s8 = inlined_call_operand.vmem [shape: f32[1,128], index: 8, kind: input, shape index: {}]
  %s9 = inlined_call_operand.hbm [shape: f32[1,128], index: 9, kind: output, shape index: {0}]
  %s10 = inlined_call_operand.hbm [shape: f32[1,128], index: 10, kind: output, shape index: {1}]
  %s11 = inlined_call_operand.vmem [shape: f32[1,10,128], index: 11, kind: output, shape index: {2}]
  %12 = xla_tuple %s9, %s10, %s11
  %s13 = sld [smem:[#allocation0]]
  $region66: #{tpu_custom_call.1} parent=0
    _
  %s15 = ssub.s32 1, %s13
  %s16 = scalar_select 0, %s15, %s13
  $region1: #{tpu_custom_call.1} parent=0
    #allocation2 [shape = 'u8[2048]{0}', space=vmem, size = 0x800, scoped, tag = 'input window, operand 0, single buffered']
    #allocation3 [shape = 's32[1]{0}', space=sflag, size = 0x4, scoped, tag = 'scoped memory for tpu_custom_call.1']
    #allocation4 [shape = 's32[1]{0}', space=sflag, size = 0x4, scoped, tag = 'scoped memory for tpu_custom_call.1']
    #allocation5 [shape = 'u8[512]{0}', space=vmem, size = 0x400, scoped, tag = 'output window, operand 0, single buffered']
    #allocation6 [shape = 'u8[512]{0}', space=vmem, size = 0x400, scoped, tag = 'output window, operand 1, single buffered']
    #allocation7 [shape = 's32[1]{0}', space=sflag, size = 0x4, scoped, tag = 'scoped memory for tpu_custom_call.1']
    %17 = vsyncpa [#allocation3], 0
    %18 = vsyncpa [#allocation4], 0
    %19 = vsyncpa [#allocation7], 0
    // Predicated region
    $region2: #{tpu_custom_call.1} parent=1 // pred_check
      _
    $region3: #{tpu_custom_call.1} parent=1 // pred_check_branch
      %21 = sbr.rel (0) target = $region5
    $region4: #{tpu_custom_call.1} parent=1 // pred_region
      %s23 = ssub.s32 64, 64
      %24 = vsyncadd [#allocation3], %s23
      %s26 = sshll.u32 [#allocation2], 4
      %s27 = int_to_ptr.vmem [resolvable:$true] %s26
      %29 = dma.hbm_to_vmem [thread:$0]  %s0, 64, %s27, [#allocation3]
    $region5: #{tpu_custom_call.1} parent=1 // pred_fallthru
      _
    // Predicated region
    $region6: #{tpu_custom_call.1} parent=1 // pred_check
      _
    $region7: #{tpu_custom_call.1} parent=1 // pred_check_branch
      %31 = sbr.rel (0) target = $region9
    $region8: #{tpu_custom_call.1} parent=1 // pred_region
      _
    $region9: #{tpu_custom_call.1} parent=1 // pred_fallthru
      _
    // Predicated region
    $region10: #{tpu_custom_call.1} parent=1 // pred_check
      _
    $region11: #{tpu_custom_call.1} parent=1 // pred_check_branch
      %33 = sbr.rel (0) target = $region13
    $region12: #{tpu_custom_call.1} parent=1 // pred_region
      _
    $region13: #{tpu_custom_call.1} parent=1 // pred_fallthru
      _
    // Predicated region
    $region14: #{tpu_custom_call.1} parent=1 // pred_check
      _
    $region15: #{tpu_custom_call.1} parent=1 // pred_check_branch
      %35 = sbr.rel (0) target = $region17
    $region16: #{tpu_custom_call.1} parent=1 // pred_region
      _
    $region17: #{tpu_custom_call.1} parent=1 // pred_fallthru
      _
    // Predicated region
    $region18: #{tpu_custom_call.1} parent=1 // pred_check
      _
    $region19: #{tpu_custom_call.1} parent=1 // pred_check_branch
      %37 = sbr.rel (0) target = $region21
    $region20: #{tpu_custom_call.1} parent=1 // pred_region
      _
    $region21: #{tpu_custom_call.1} parent=1 // pred_fallthru
      _
    // Predicated region
    $region22: #{tpu_custom_call.1} parent=1 // pred_check
      _
    $region23: #{tpu_custom_call.1} parent=1 // pred_check_branch
      %39 = sbr.rel (0) target = $region25
    $region24: #{tpu_custom_call.1} parent=1 // pred_region
      _
    $region25: #{tpu_custom_call.1} parent=1 // pred_fallthru
      _
    // Predicated region
    $region26: #{tpu_custom_call.1} parent=1 // pred_check
      _
    $region27: #{tpu_custom_call.1} parent=1 // pred_check_branch
      %41 = sbr.rel (0) target = $region29
    $region28: #{tpu_custom_call.1} parent=1 // pred_region
      _
    $region29: #{tpu_custom_call.1} parent=1 // pred_fallthru
      _
    // Predicated region
    $region30: #{tpu_custom_call.1} parent=1 // pred_check
      _
    $region31: #{tpu_custom_call.1} parent=1 // pred_check_branch
      %43 = sbr.rel (0) target = $region33
    $region32: #{tpu_custom_call.1} parent=1 // pred_region
      _
    $region33: #{tpu_custom_call.1} parent=1 // pred_fallthru
      _
    // Predicated region
    $region34: #{tpu_custom_call.1} parent=1 // pred_check
      _
    $region35: #{tpu_custom_call.1} parent=1 // pred_check_branch
      %45 = sbr.rel (0) target = $region37
    $region36: #{tpu_custom_call.1} parent=1 // pred_region
      _
    $region37: #{tpu_custom_call.1} parent=1 // pred_fallthru
      _
    // Predicated region
    $region38: #{tpu_custom_call.1} parent=1 // pred_check
      _
    $region39: #{tpu_custom_call.1} parent=1 // pred_check_branch
      %47 = sbr.rel (0) target = $region41
    $region40: #{tpu_custom_call.1} parent=1 // pred_region
      %48 = dma.done [#allocation3], 64
    $region41: #{tpu_custom_call.1} parent=1 // pred_fallthru
      _
    %v50 = vld [vmem:[%s1] sm:$0x1]
    %v51 = vld [vmem:[%s3] sm:$0xf]
    %v52 = vld [vmem:[%s3 + $0x4] sm:$0xf]
    %v53 = vld [vmem:[%s3 + $0x8] sm:$0xf]
    %v54 = vld [vmem:[%s3 + $0xc] sm:$0xf]
    %v59 = vunpack.c.l.b16 %v51
    %v60 = vunpack.c.l.b16 %v52
    %v61 = vunpack.c.l.b16 %v53
    %v62 = vunpack.c.l.b16 %v54
    %v63 = vpack.c.b16 %v60, %v59
    %v64 = vpack.c.b16 %v62, %v61
    %vm67 = vcmask 261120
    %v69 = vsel %vm67, %v50, 0
    %71 = vmatprep.subr.bf16.mxu0 0
    %72 = vmatpush1.bf16.msra.mxu0 %v63
    %73 = vmatprep.subr.bf16.mxu0 0
    %74 = vmatpush1.bf16.msra.mxu0 %v64
    %75 = vmatprep.subr.bf16.mxu0 0
    %76 = vmatpush1.bf16.msra.mxu0 0
    %77 = vmatprep.subr.bf16.mxu0 0
    %78 = vmatpush1.bf16.msra.mxu0 0
    %79 = vmatprep.subr.bf16.mxu0 0
    %80 = vmatpush1.bf16.msra.mxu0 0
    %81 = vmatprep.subr.bf16.mxu0 0
    %82 = vmatpush1.bf16.msra.mxu0 0
    %83 = vmatprep.subr.bf16.mxu0 0
    %84 = vmatpush1.bf16.msra.mxu0 0
    %85 = vmatprep.subr.bf16.mxu0 0
    %86 = vmatpush1.bf16.msra.mxu0 0
    %87 = vmatprep.subr.bf16.mxu0 0
    %88 = vmatpush1.bf16.msra.mxu0 0
    %89 = vmatprep.subr.bf16.mxu0 0
    %90 = vmatpush1.bf16.msra.mxu0 0
    %91 = vmatprep.subr.bf16.mxu0 0
    %92 = vmatpush1.bf16.msra.mxu0 0
    %93 = vmatprep.subr.bf16.mxu0 0
    %94 = vmatpush1.bf16.msra.mxu0 0
    %95 = vmatprep.subr.bf16.mxu0 0
    %96 = vmatpush1.bf16.msra.mxu0 0
    %97 = vmatprep.subr.bf16.mxu0 0
    %98 = vmatpush1.bf16.msra.mxu0 0
    %99 = vmatprep.subr.bf16.mxu0 0
    %100 = vmatpush1.bf16.msra.mxu0 0
    %101 = vmatprep.subr.bf16.mxu0 0
    %102 = vmatpush1.bf16.msra.mxu0 0
    %103 = vmatprep.mubr.bf16.mxu0 0
    %104 = vmatmul.mubr.bf16.gmra.mrb[0].mxu0 %v69
    %v105 = vpop.f32.mrb[0].mxu0
    %v106 = vadd.f32 0.0, %v105
    %v107 = vpop.f32.mrb[0].mxu0
    %v108 = vpop.f32.mrb[0].mxu0
    %v109 = vpop.f32.mrb[0].mxu0
    %110 = vdwg.mxu0
    %v111 = vpack.c.bf16 %v106, %v106
    %v112 = vld [vmem:[#allocation2] sm:$0xf]
    %vm113 = vcmask 64512
    %v115 = vsel %vm113, %v111, 0
    %vm117 = vcmask 1043456
    %v119 = vsel %vm117, %v112, 0
    %121 = vmatprep.subr.bf16.mxu0 0
    %122 = vmatpush1.bf16.msra.mxu0 %v119
    %123 = vmatprep.subr.bf16.mxu0 0
    %124 = vmatpush1.bf16.msra.mxu0 0
    %125 = vmatprep.subr.bf16.mxu0 0
    %126 = vmatpush1.bf16.msra.mxu0 0
    %127 = vmatprep.subr.bf16.mxu0 0
    %128 = vmatpush1.bf16.msra.mxu0 0
    %129 = vmatprep.subr.bf16.mxu0 0
    %130 = vmatpush1.bf16.msra.mxu0 0
    %131 = vmatprep.subr.bf16.mxu0 0
    %132 = vmatpush1.bf16.msra.mxu0 0
    %133 = vmatprep.subr.bf16.mxu0 0
    %134 = vmatpush1.bf16.msra.mxu0 0
    %135 = vmatprep.subr.bf16.mxu0 0
    %136 = vmatpush1.bf16.msra.mxu0 0
    %137 = vmatprep.subr.bf16.mxu0 0
    %138 = vmatpush1.bf16.msra.mxu0 0
    %139 = vmatprep.subr.bf16.mxu0 0
    %140 = vmatpush1.bf16.msra.mxu0 0
    %141 = vmatprep.subr.bf16.mxu0 0
    %142 = vmatpush1.bf16.msra.mxu0 0
    %143 = vmatprep.subr.bf16.mxu0 0
    %144 = vmatpush1.bf16.msra.mxu0 0
    %145 = vmatprep.subr.bf16.mxu0 0
    %146 = vmatpush1.bf16.msra.mxu0 0
    %147 = vmatprep.subr.bf16.mxu0 0
    %148 = vmatpush1.bf16.msra.mxu0 0
    %149 = vmatprep.subr.bf16.mxu0 0
    %150 = vmatpush1.bf16.msra.mxu0 0
    %151 = vmatprep.subr.bf16.mxu0 0
    %152 = vmatpush1.bf16.msra.mxu0 0
    %153 = vmatprep.mubr.bf16.mxu0 0
    %154 = vmatmul.mubr.bf16.gmra.mrb[0].mxu0 %v115
    %v155 = vpop.f32.mrb[0].mxu0
    %v156 = vadd.f32 0.0, %v155
    %v157 = vpop.f32.mrb[0].mxu0
    %v158 = vpop.f32.mrb[0].mxu0
    %v159 = vpop.f32.mrb[0].mxu0
    %160 = vdwg.mxu0
    %v161 = vmul.f32 %v156, 0.125
    %v162 = vpack.c.bf16 %v161, %v161
    %v165 = vunpack.c.l.s4 1966171168
    %v166 = vunpack.c.0.s8 %v165
    %v167 = vlaneseq
    %v168 = vshrl.u32 %v167, 7
    %v169 = vsub.s32 %v166, %v168
    %v170 = vrot.slane %v50, %v169
    %v172 = vunpack.c.l.s4 1966171168
    %v173 = vunpack.c.0.s8 %v172
    %v174 = vlaneseq
    %v175 = vshrl.u32 %v174, 7
    %v176 = vsub.s32 %v173, %v175
    %v177 = vrot.slane %v170, %v176
    %v179 = vshll.u32 %v177, 16
    %vm182 = vcmask 1040384
    %vm183 = vsmask.f32 256
    %vm184 = vmand %vm182, %vm183
    %v185 = vsel %vm184, %v162, %v179
    %v186 = vld [vmem:[%s4] sm:$0xf]
    %v187 = vld [vmem:[%s4 + $0x4] sm:$0xf]
    %v188 = vld [vmem:[%s4 + $0x8] sm:$0xf]
    %v189 = vld [vmem:[%s4 + $0xc] sm:$0xf]
    %v194 = vunpack.c.l.b16 %v186
    %v195 = vunpack.c.l.b16 %v187
    %v196 = vunpack.c.l.b16 %v188
    %v197 = vunpack.c.l.b16 %v189
    %v198 = vpack.c.b16 %v195, %v194
    %v199 = vpack.c.b16 %v197, %v196
    %v203 = vsel %vm67, %v185, 0
    %205 = vmatprep.subr.bf16.mxu0 0
    %206 = vmatpush1.bf16.msra.mxu0 %v198
    %207 = vmatprep.subr.bf16.mxu0 0
    %208 = vmatpush1.bf16.msra.mxu0 %v199
    %209 = vmatprep.subr.bf16.mxu0 0
    %210 = vmatpush1.bf16.msra.mxu0 0
    %211 = vmatprep.subr.bf16.mxu0 0
    %212 = vmatpush1.bf16.msra.mxu0 0
    %213 = vmatprep.subr.bf16.mxu0 0
    %214 = vmatpush1.bf16.msra.mxu0 0
    %215 = vmatprep.subr.bf16.mxu0 0
    %216 = vmatpush1.bf16.msra.mxu0 0
    %217 = vmatprep.subr.bf16.mxu0 0
    %218 = vmatpush1.bf16.msra.mxu0 0
    %219 = vmatprep.subr.bf16.mxu0 0
    %220 = vmatpush1.bf16.msra.mxu0 0
    %221 = vmatprep.subr.bf16.mxu0 0
    %222 = vmatpush1.bf16.msra.mxu0 0
    %223 = vmatprep.subr.bf16.mxu0 0
    %224 = vmatpush1.bf16.msra.mxu0 0
    %225 = vmatprep.subr.bf16.mxu0 0
    %226 = vmatpush1.bf16.msra.mxu0 0
    %227 = vmatprep.subr.bf16.mxu0 0
    %228 = vmatpush1.bf16.msra.mxu0 0
    %229 = vmatprep.subr.bf16.mxu0 0
    %230 = vmatpush1.bf16.msra.mxu0 0
    %231 = vmatprep.subr.bf16.mxu0 0
    %232 = vmatpush1.bf16.msra.mxu0 0
    %233 = vmatprep.subr.bf16.mxu0 0
    %234 = vmatpush1.bf16.msra.mxu0 0
    %235 = vmatprep.subr.bf16.mxu0 0
    %236 = vmatpush1.bf16.msra.mxu0 0
    %237 = vmatprep.mubr.bf16.mxu0 0
    %238 = vmatmul.mubr.bf16.gmra.mrb[0].mxu0 %v203
    %v239 = vpop.f32.mrb[0].mxu0
    %v240 = vadd.f32 0.0, %v239
    %v241 = vpop.f32.mrb[0].mxu0
    %v242 = vpop.f32.mrb[0].mxu0
    %v243 = vpop.f32.mrb[0].mxu0
    %244 = vdwg.mxu0
    %245 = vst [vmem:[#allocation5] sm:$0x1] %v240
    %246 = vst [vmem:[#allocation6 - $0x1] sm:$0x2] %v240
    %v247 = vunpack.c.l.bf16 %v50
    %vm248 = vcmask 253952
    %v249 = vsel %vm248, %v161, 0.0
    %250 = vadd.xlane.f32.xlu0 %v249
    %v251 = vpop.xlane.xlu0 %250
    %v252 = vrcp.pop 32.0
    %v253 = vmul.f32 %v251, %v252
    %v254 = vadd.f32 %v253, %v247
    %v255 = vpack.c.bf16 %v254, %v254
    %v256 = vld [vmem:[%s5] sm:$0xf]
    %v257 = vld [vmem:[%s5 + $0x4] sm:$0xf]
    %v258 = vld [vmem:[%s5 + $0x8] sm:$0xf]
    %v259 = vld [vmem:[%s5 + $0xc] sm:$0xf]
    %v260 = vld [vmem:[%s6] sm:$0x1]
    %v265 = vunpack.c.l.b16 %v256
    %v266 = vunpack.c.l.b16 %v257
    %v267 = vunpack.c.l.b16 %v258
    %v268 = vunpack.c.l.b16 %v259
    %v269 = vpack.c.b16 %v266, %v265
    %v270 = vpack.c.b16 %v268, %v267
    %v274 = vsel %vm67, %v255, 0
    %276 = vmatprep.subr.bf16.mxu0 0
    %277 = vmatpush1.bf16.msra.mxu0 %v269
    %278 = vmatprep.subr.bf16.mxu0 0
    %279 = vmatpush1.bf16.msra.mxu0 %v270
    %280 = vmatprep.subr.bf16.mxu0 0
    %281 = vmatpush1.bf16.msra.mxu0 0
    %282 = vmatprep.subr.bf16.mxu0 0
    %283 = vmatpush1.bf16.msra.mxu0 0
    %284 = vmatprep.subr.bf16.mxu0 0
    %285 = vmatpush1.bf16.msra.mxu0 0
    %286 = vmatprep.subr.bf16.mxu0 0
    %287 = vmatpush1.bf16.msra.mxu0 0
    %288 = vmatprep.subr.bf16.mxu0 0
    %289 = vmatpush1.bf16.msra.mxu0 0
    %290 = vmatprep.subr.bf16.mxu0 0
    %291 = vmatpush1.bf16.msra.mxu0 0
    %292 = vmatprep.subr.bf16.mxu0 0
    %293 = vmatpush1.bf16.msra.mxu0 0
    %294 = vmatprep.subr.bf16.mxu0 0
    %295 = vmatpush1.bf16.msra.mxu0 0
    %296 = vmatprep.subr.bf16.mxu0 0
    %297 = vmatpush1.bf16.msra.mxu0 0
    %298 = vmatprep.subr.bf16.mxu0 0
    %299 = vmatpush1.bf16.msra.mxu0 0
    %300 = vmatprep.subr.bf16.mxu0 0
    %301 = vmatpush1.bf16.msra.mxu0 0
    %302 = vmatprep.subr.bf16.mxu0 0
    %303 = vmatpush1.bf16.msra.mxu0 0
    %304 = vmatprep.subr.bf16.mxu0 0
    %305 = vmatpush1.bf16.msra.mxu0 0
    %306 = vmatprep.subr.bf16.mxu0 0
    %307 = vmatpush1.bf16.msra.mxu0 0
    %308 = vmatprep.mubr.bf16.mxu0 0
    %309 = vmatmul.mubr.bf16.gmra.mrb[0].mxu0 %v274
    %v310 = vpop.f32.mrb[0].mxu0
    %v311 = vadd.f32 %v260, %v310
    %v312 = vpop.f32.mrb[0].mxu0
    %v313 = vpop.f32.mrb[0].mxu0
    %v314 = vpop.f32.mrb[0].mxu0
    %315 = vdwg.mxu0
    %v316 = vmax.f32 %v311, 0.0
    %v317 = vpack.c.bf16 %v316, %v316
    %v318 = vld [vmem:[%s7] sm:$0xf]
    %v319 = vld [vmem:[%s7 + $0x4] sm:$0xf]
    %v320 = vld [vmem:[%s8] sm:$0x1]
    %v323 = vunpack.c.l.b16 %v318
    %v324 = vunpack.c.l.b16 %v319
    %v325 = vpack.c.b16 %v324, %v323
    %vm327 = vcmask 130048
    %v329 = vsel %vm327, %v317, 0
    %331 = vmatprep.subr.bf16.mxu0 0
    %332 = vmatpush1.bf16.msra.mxu0 %v325
    %333 = vmatprep.subr.bf16.mxu0 0
    %334 = vmatpush1.bf16.msra.mxu0 0
    %335 = vmatprep.subr.bf16.mxu0 0
    %336 = vmatpush1.bf16.msra.mxu0 0
    %337 = vmatprep.subr.bf16.mxu0 0
    %338 = vmatpush1.bf16.msra.mxu0 0
    %339 = vmatprep.subr.bf16.mxu0 0
    %340 = vmatpush1.bf16.msra.mxu0 0
    %341 = vmatprep.subr.bf16.mxu0 0
    %342 = vmatpush1.bf16.msra.mxu0 0
    %343 = vmatprep.subr.bf16.mxu0 0
    %344 = vmatpush1.bf16.msra.mxu0 0
    %345 = vmatprep.subr.bf16.mxu0 0
    %346 = vmatpush1.bf16.msra.mxu0 0
    %347 = vmatprep.subr.bf16.mxu0 0
    %348 = vmatpush1.bf16.msra.mxu0 0
    %349 = vmatprep.subr.bf16.mxu0 0
    %350 = vmatpush1.bf16.msra.mxu0 0
    %351 = vmatprep.subr.bf16.mxu0 0
    %352 = vmatpush1.bf16.msra.mxu0 0
    %353 = vmatprep.subr.bf16.mxu0 0
    %354 = vmatpush1.bf16.msra.mxu0 0
    %355 = vmatprep.subr.bf16.mxu0 0
    %356 = vmatpush1.bf16.msra.mxu0 0
    %357 = vmatprep.subr.bf16.mxu0 0
    %358 = vmatpush1.bf16.msra.mxu0 0
    %359 = vmatprep.subr.bf16.mxu0 0
    %360 = vmatpush1.bf16.msra.mxu0 0
    %361 = vmatprep.subr.bf16.mxu0 0
    %362 = vmatpush1.bf16.msra.mxu0 0
    %363 = vmatprep.mubr.bf16.mxu0 0
    %364 = vmatmul.mubr.bf16.gmra.mrb[0].mxu0 %v329
    %v365 = vpop.f32.mrb[0].mxu0
    %v366 = vadd.f32 %v320, %v365
    %v367 = vpop.f32.mrb[0].mxu0
    %v368 = vpop.f32.mrb[0].mxu0
    %v369 = vpop.f32.mrb[0].mxu0
    %370 = vdwg.mxu0
    %vm371 = vcmask 1040384
    %v372 = vsel %vm371, %v366, -inf
    %373 = vmax.xlane.f32.xlu0 %v372
    %v374 = vpop.xlane.xlu0 %373
    %v375 = vsub.f32 %v366, %v374
    %v376 = vmul.f32 %v375, 1.442695
    %v377 = vpow.pop %v376
    %v378 = vsel %vm371, %v377, 0.0
    %379 = vadd.xlane.f32.xlu0 %v378
    %v380 = vpop.xlane.xlu0 %379
    %v381 = vrcp.pop %v380
    %v382 = vmul.f32 %v377, %v381
    %v383 = vld [vmem:[%s2] sm:$0xff]
    %v384 = vld [vmem:[%s2 + $0x8] sm:$0x3]
    %v385 = vlaneseq
    %v386 = vshrl.u32 %v385, 7
    %v387 = vsub.s32 0, %v386
    %v388 = vrot.slane %v382, %v387
    %v389 = vmul.f32 %v388, %v383
    %v390 = vmul.f32 %v388, %v384
    %391 = vst [vmem:[%s11] sm:$0xff] %v389
    %392 = vst [vmem:[%s11 + $0x8] sm:$0x3] %v390
    // Predicated region
    $region42: #{tpu_custom_call.1} parent=1 // pred_check
      _
    $region43: #{tpu_custom_call.1} parent=1 // pred_check_branch
      %394 = sbr.rel (0) target = $region45
    $region44: #{tpu_custom_call.1} parent=1 // pred_region
      %s396 = ssub.s32 16, 16
      %397 = vsyncadd [#allocation4], %s396
      %s399 = sshll.u32 [#allocation5], 4
      %s400 = int_to_ptr.vmem [resolvable:$true] %s399
      %402 = dma.vmem_to_hbm [thread:$0]  %s400, 16, %s9, [#allocation4]
    $region45: #{tpu_custom_call.1} parent=1 // pred_fallthru
      _
    // Predicated region
    $region46: #{tpu_custom_call.1} parent=1 // pred_check
      _
    $region47: #{tpu_custom_call.1} parent=1 // pred_check_branch
      %404 = sbr.rel (0) target = $region49
    $region48: #{tpu_custom_call.1} parent=1 // pred_region
      %s406 = ssub.s32 16, 16
      %407 = vsyncadd [#allocation7], %s406
      %s409 = sshll.u32 [#allocation6], 4
      %s410 = int_to_ptr.vmem [resolvable:$true] %s409
      %412 = dma.vmem_to_hbm [thread:$0]  %s410, 16, %s10, [#allocation7]
    $region49: #{tpu_custom_call.1} parent=1 // pred_fallthru
      _
    // Predicated region
    $region50: #{tpu_custom_call.1} parent=1 // pred_check
      _
    $region51: #{tpu_custom_call.1} parent=1 // pred_check_branch
      %414 = sbr.rel (0) target = $region53
    $region52: #{tpu_custom_call.1} parent=1 // pred_region
      _
    $region53: #{tpu_custom_call.1} parent=1 // pred_fallthru
      _
    // Predicated region
    $region54: #{tpu_custom_call.1} parent=1 // pred_check
      _
    $region55: #{tpu_custom_call.1} parent=1 // pred_check_branch
      %416 = sbr.rel (0) target = $region57
    $region56: #{tpu_custom_call.1} parent=1 // pred_region
      %417 = dma.done [#allocation4], 16
    $region57: #{tpu_custom_call.1} parent=1 // pred_fallthru
      _
    // Predicated region
    $region58: #{tpu_custom_call.1} parent=1 // pred_check
      _
    $region59: #{tpu_custom_call.1} parent=1 // pred_check_branch
      %419 = sbr.rel (0) target = $region61
    $region60: #{tpu_custom_call.1} parent=1 // pred_region
      %420 = dma.done [#allocation7], 16
    $region61: #{tpu_custom_call.1} parent=1 // pred_fallthru
      _
    // Predicated region
    $region62: #{tpu_custom_call.1} parent=1 // pred_check
      _
    $region63: #{tpu_custom_call.1} parent=1 // pred_check_branch
      %422 = sbr.rel (0) target = $region65
    $region64: #{tpu_custom_call.1} parent=1 // pred_region
      _
    $region65: #{tpu_custom_call.1} parent=1 // pred_fallthru
      _
    %423 = vsyncpa [#allocation3], 1
    %424 = vsyncpa [#allocation4], 1
    %425 = vsyncpa [#allocation7], 1

</llo_original>
